<compile_context>
chip_gen: v6e
topology: v6e:2x2x1
jax: 0.10.0
libtpu: 0.0.40
codegen_flags: <defaults>
</compile_context>

<pallas_src>
import functools

import jax
import jax.numpy as jnp
from jax.experimental import pallas as pl
from jax.experimental.pallas import tpu as pltpu


ALPHA = 0.1
LANE = 128      # TPU lane width (last dim)
SUBLANE = 8     # TPU sublane width (second-to-last dim)


def gcn_sse_kernel(a_ref, x_ref, w1_ref, b1_ref, w2_ref, b2_ref,
                   w3_ref, b3_ref, out_ref, *, alpha):
    a = a_ref[...]                                    # [N, N]  bf16 (0/1, exact)
    x = x_ref[...]                                    # [N, INp] f32

    # Degrees via MXU matvec (128-wide ones keeps the op lane-dense).  The
    # adjacency is assumed symmetric, so row degrees serve both sides of the
    # normalization (matches DGL norm='both' on this graph, and the reference).
    ones = jnp.ones((a.shape[0], LANE), dtype=jnp.bfloat16)
    deg = jnp.dot(a, ones, preferred_element_type=jnp.float32)[:, :1]   # [N,1] f32
    dis = jax.lax.rsqrt(jnp.maximum(deg, 1e-12))                        # [N,1] f32

    def aggregate(z):
        # A_hat @ z  ==  dis * (A @ (dis * z))   -- A_hat never materialized.
        zs = (dis * z).astype(jnp.bfloat16)
        agg = jnp.dot(a, zs, preferred_element_type=jnp.float32)
        return dis * agg

    # Layer 1 (aggregate-then-transform; identical math, cheaper when IN < H):
    ax = aggregate(x)                                                   # [N, INp]
    h1 = jnp.maximum(
        jnp.dot(ax.astype(jnp.bfloat16), w1_ref[...],
                preferred_element_type=jnp.float32) + b1_ref[...],
        0.0)

    # Layer 2: relu(A_hat @ (h1 W2) + b2)
    hw2 = jnp.dot(h1.astype(jnp.bfloat16), w2_ref[...],
                  preferred_element_type=jnp.float32)
    h2 = jnp.maximum(aggregate(hw2) + b2_ref[...], 0.0)

    # SSE residual mixing (kept in f32 on the VPU)
    h2u = (1.0 - alpha) * h1 + alpha * h2

    # Layer 3 (no activation): A_hat @ (h2u W3) + b3
    hw3 = jnp.dot(h2u.astype(jnp.bfloat16), w3_ref[...],
                  preferred_element_type=jnp.float32)
    out_ref[...] = (aggregate(hw3) + b3_ref[...]).astype(out_ref.dtype)


def _round_up(v, m):
    return ((v + m - 1) // m) * m


def _prep(arr, shape, dtype):
    """Zero-pad to `shape` and cast — pure layout plumbing, no compute hoist."""
    if arr.shape != shape:
        arr = jnp.pad(arr, [(0, t - s) for s, t in zip(arr.shape, shape)])
    return arr.astype(dtype)


def gcn_sse_forward(adj, x, params, alpha=ALPHA):
    """adj: [N,N] symmetric (0/1 + self loops), x: [N,IN], params: dict."""
    n, in_feats = x.shape
    h_feats = params["w1"].shape[1]
    out_feats = params["w3"].shape[1]

    n_p = _round_up(n, SUBLANE)
    in_p = _round_up(in_feats, LANE)
    h_p = _round_up(h_feats, LANE)
    out_p = _round_up(out_feats, LANE)

    # Lane-pad feature dims, sublane-pad the node dim, and store the 0/1
    # adjacency + weights in bf16 (exact for adjacency).  In production these
    # would already live padded / bf16 in HBM, making this prep a no-op.
    a_p = _prep(adj, (n_p, n_p), jnp.bfloat16)
    x_p = _prep(x, (n_p, in_p), jnp.float32)
    w1_p = _prep(params["w1"], (in_p, h_p), jnp.bfloat16)
    b1_p = _prep(params["b1"], (1, h_p), jnp.float32)
    w2_p = _prep(params["w2"], (h_p, h_p), jnp.bfloat16)
    b2_p = _prep(params["b2"], (1, h_p), jnp.float32)
    w3_p = _prep(params["w3"], (h_p, out_p), jnp.bfloat16)
    b3_p = _prep(params["b3"], (1, out_p), jnp.float32)

    full = lambda shp: pl.BlockSpec(shp, lambda: (0,) * len(shp))

    # Explicit scoped-VMEM budget with headroom (whole arrays resident here).
    operand_bytes = sum(int(t.size) * t.dtype.itemsize
                        for t in (a_p, x_p, w1_p, b1_p, w2_p, b2_p, w3_p, b3_p))
    operand_bytes += n_p * out_p * 4                          # output block
    operand_bytes += 8 * n_p * max(in_p, h_p, out_p) * 4      # live intermediates
    vmem_limit = int(min(48 * 1024 * 1024,
                         max(16 * 1024 * 1024, 2 * operand_bytes)))

    # TODO(synk): for graphs too large for whole-array residency (bf16 adjacency
    # beyond ~40 MiB, i.e. N > ~4500 on v7x's 64 MiB VMEM), split into per-layer
    # row-tiled pallas_calls (aggregate-then-transform per row tile) with a
    # "parallel" node-row grid axis so v7x's two TensorCores split the work;
    # the 3-layer fusion here cannot be row-tiled inside one call because layer
    # k+1 needs all rows of layer k.
    # TODO(synk): for many small graphs, add a leading batch grid axis (marked
    # "parallel") instead of one pallas_call per graph to amortize launch/DMA
    # prologue overhead.
    out_padded = pl.pallas_call(
        functools.partial(gcn_sse_kernel, alpha=alpha),
        out_shape=jax.ShapeDtypeStruct((n_p, out_p), jnp.float32),
        in_specs=[
            full(a_p.shape),
            full(x_p.shape),
            full(w1_p.shape), full(b1_p.shape),
            full(w2_p.shape), full(b2_p.shape),
            full(w3_p.shape), full(b3_p.shape),
        ],
        out_specs=full((n_p, out_p)),
        compiler_params=pltpu.CompilerParams(vmem_limit_bytes=vmem_limit),
    )(a_p, x_p, w1_p, b1_p, w2_p, b2_p, w3_p, b3_p)

    # Strip the lane/sublane padding.
    return out_padded[:n, :out_feats]


def init_params(key, in_feats, h_feats, out_feats):
    ks = jax.random.split(key, 8)
    scale = lambda fan_in: 1.0 / jnp.sqrt(jnp.float32(fan_in))
    params = {
        # GraphConv weights: [in, out], biases broadcast as [1, out]
        "w1": jax.random.normal(ks[0], (in_feats, h_feats), jnp.float32) * scale(in_feats),
        "b1": jnp.zeros((1, h_feats), jnp.float32),
        "w2": jax.random.normal(ks[1], (h_feats, h_feats), jnp.float32) * scale(h_feats),
        "b2": jnp.zeros((1, h_feats), jnp.float32),
        "w3": jax.random.normal(ks[2], (h_feats, out_feats), jnp.float32) * scale(h_feats),
        "b3": jnp.zeros((1, out_feats), jnp.float32),
        # self.fc exists in __init__ but is unused in forward(); kept for fidelity.
        "fc_w": jax.random.normal(ks[3], (in_feats, h_feats), jnp.float32) * scale(in_feats),
        "fc_b": jnp.zeros((1, h_feats), jnp.float32),
    }
    return params


if __name__ == "__main__":
    # Small deterministic example: 64 nodes, in=16, hidden=32, out=8.
    N, IN_FEATS, H_FEATS, OUT_FEATS = 64, 16, 32, 8

    key = jax.random.PRNGKey(0)
    k_adj, k_x, k_p = jax.random.split(key, 3)

    # Random symmetric adjacency with self-loops (no zero degrees, matching
    # DGL's requirement; symmetry is assumed by the normalization folding).
    rand = jax.random.uniform(k_adj, (N, N))
    adj = (rand < 0.1).astype(jnp.float32)
    adj = jnp.maximum(adj, adj.T)                            # symmetrize
    adj = jnp.maximum(adj, jnp.eye(N, dtype=jnp.float32))    # self-loops

    x = jax.random.normal(k_x, (N, IN_FEATS), jnp.float32)
    params = init_params(k_p, IN_FEATS, H_FEATS, OUT_FEATS)

    out = gcn_sse_forward(adj, x, params)
    jax.block_until_ready(out)

    # Pure-JAX f32 reference (kernel uses bf16 MXU operands -> loose tolerance).
    deg = jnp.sum(adj, axis=1)
    dis = 1.0 / jnp.sqrt(jnp.maximum(deg, 1e-12))
    a_hat = dis[:, None] * adj * dis[None, :]
    h1 = jax.nn.relu(a_hat @ (x @ params["w1"]) + params["b1"])
    h2 = jax.nn.relu(a_hat @ (h1 @ params["w2"]) + params["b2"])
    h2u = (1.0 - ALPHA) * h1 + ALPHA * h2
    ref = a_hat @ (h2u @ params["w3"]) + params["b3"]

    assert out.shape == (N, OUT_FEATS)
    max_err = float(jnp.max(jnp.abs(out - ref)))
    assert jnp.allclose(out, ref, atol=3e-2, rtol=3e-2), f"max abs err {max_err}"

    print("KERNEL_OK")
</pallas_src>

<mosaic_0001>
module attributes {stable_mosaic.version = 11 : i64} {
  func.func @gcn_sse_kernel(%arg0: memref<64x64xbf16, #tpu.memory_space<vmem>>, %arg1: memref<64x128xf32, #tpu.memory_space<vmem>>, %arg2: memref<128x128xbf16, #tpu.memory_space<vmem>>, %arg3: memref<1x128xf32, #tpu.memory_space<vmem>>, %arg4: memref<128x128xbf16, #tpu.memory_space<vmem>>, %arg5: memref<1x128xf32, #tpu.memory_space<vmem>>, %arg6: memref<128x128xbf16, #tpu.memory_space<vmem>>, %arg7: memref<1x128xf32, #tpu.memory_space<vmem>>, %arg8: memref<64x128xf32, #tpu.memory_space<vmem>>) attributes {dimension_semantics = [], scalar_prefetch = 0 : i64, scratch_operands = 0 : i64, tpu.core_type = #tpu.core_type<tc>} {
    %c0 = arith.constant 0 : index
    %c0_0 = arith.constant 0 : index
    %0 = vector.load %arg0[%c0, %c0_0] : memref<64x64xbf16, #tpu.memory_space<vmem>>, vector<64x64xbf16>
    %c0_1 = arith.constant 0 : index
    %c0_2 = arith.constant 0 : index
    %1 = vector.load %arg1[%c0_1, %c0_2] : memref<64x128xf32, #tpu.memory_space<vmem>>, vector<64x128xf32>
    %cst = arith.constant 1.000000e+00 : bf16
    %2 = vector.broadcast %cst : bf16 to vector<64x128xbf16>
    %cst_3 = arith.constant dense<0.000000e+00> : vector<64x128xf32>
    %3 = tpu.matmul %0, %2, %cst_3 {dimension_numbers = #tpu.dot_dimension_numbers<[1], [0], [0], [1], [0, 0, 1, 1], [], []>} : vector<64x64xbf16>, vector<64x128xbf16>, vector<64x128xf32> -> vector<64x128xf32>
    %4 = vector.extract_strided_slice %3 {offsets = [0, 0], sizes = [64, 1], strides = [1, 1]} : vector<64x128xf32> to vector<64x1xf32>
    %cst_4 = arith.constant 9.99999996E-13 : f32
    %5 = vector.broadcast %cst_4 : f32 to vector<64x1xf32>
    %6 = arith.maximumf %4, %5 : vector<64x1xf32>
    %7 = math.rsqrt %6 : vector<64x1xf32>
    %8 = vector.broadcast %7 : vector<64x1xf32> to vector<64x128xf32>
    %9 = arith.mulf %8, %1 : vector<64x128xf32>
    %10 = arith.truncf %9 : vector<64x128xf32> to vector<64x128xbf16>
    %cst_5 = arith.constant dense<0.000000e+00> : vector<64x128xf32>
    %11 = tpu.matmul %0, %10, %cst_5 {dimension_numbers = #tpu.dot_dimension_numbers<[1], [0], [0], [1], [0, 0, 1, 1], [], []>} : vector<64x64xbf16>, vector<64x128xbf16>, vector<64x128xf32> -> vector<64x128xf32>
    %12 = vector.broadcast %7 : vector<64x1xf32> to vector<64x128xf32>
    %13 = arith.mulf %12, %11 : vector<64x128xf32>
    %14 = arith.truncf %13 : vector<64x128xf32> to vector<64x128xbf16>
    %c0_6 = arith.constant 0 : index
    %c0_7 = arith.constant 0 : index
    %15 = vector.load %arg2[%c0_6, %c0_7] : memref<128x128xbf16, #tpu.memory_space<vmem>>, vector<128x128xbf16>
    %cst_8 = arith.constant dense<0.000000e+00> : vector<64x128xf32>
    %16 = tpu.matmul %14, %15, %cst_8 {dimension_numbers = #tpu.dot_dimension_numbers<[1], [0], [0], [1], [0, 0, 1, 1], [], []>} : vector<64x128xbf16>, vector<128x128xbf16>, vector<64x128xf32> -> vector<64x128xf32>
    %c0_9 = arith.constant 0 : index
    %c0_10 = arith.constant 0 : index
    %17 = vector.load %arg3[%c0_9, %c0_10] : memref<1x128xf32, #tpu.memory_space<vmem>>, vector<1x128xf32>
    %18 = vector.broadcast %17 : vector<1x128xf32> to vector<64x128xf32>
    %19 = arith.addf %16, %18 : vector<64x128xf32>
    %cst_11 = arith.constant 0.000000e+00 : f32
    %20 = vector.broadcast %cst_11 : f32 to vector<64x128xf32>
    %21 = arith.maximumf %19, %20 : vector<64x128xf32>
    %22 = arith.truncf %21 : vector<64x128xf32> to vector<64x128xbf16>
    %c0_12 = arith.constant 0 : index
    %c0_13 = arith.constant 0 : index
    %23 = vector.load %arg4[%c0_12, %c0_13] : memref<128x128xbf16, #tpu.memory_space<vmem>>, vector<128x128xbf16>
    %cst_14 = arith.constant dense<0.000000e+00> : vector<64x128xf32>
    %24 = tpu.matmul %22, %23, %cst_14 {dimension_numbers = #tpu.dot_dimension_numbers<[1], [0], [0], [1], [0, 0, 1, 1], [], []>} : vector<64x128xbf16>, vector<128x128xbf16>, vector<64x128xf32> -> vector<64x128xf32>
    %25 = vector.broadcast %7 : vector<64x1xf32> to vector<64x128xf32>
    %26 = arith.mulf %25, %24 : vector<64x128xf32>
    %27 = arith.truncf %26 : vector<64x128xf32> to vector<64x128xbf16>
    %cst_15 = arith.constant dense<0.000000e+00> : vector<64x128xf32>
    %28 = tpu.matmul %0, %27, %cst_15 {dimension_numbers = #tpu.dot_dimension_numbers<[1], [0], [0], [1], [0, 0, 1, 1], [], []>} : vector<64x64xbf16>, vector<64x128xbf16>, vector<64x128xf32> -> vector<64x128xf32>
    %29 = vector.broadcast %7 : vector<64x1xf32> to vector<64x128xf32>
    %30 = arith.mulf %29, %28 : vector<64x128xf32>
    %c0_16 = arith.constant 0 : index
    %c0_17 = arith.constant 0 : index
    %31 = vector.load %arg5[%c0_16, %c0_17] : memref<1x128xf32, #tpu.memory_space<vmem>>, vector<1x128xf32>
    %32 = vector.broadcast %31 : vector<1x128xf32> to vector<64x128xf32>
    %33 = arith.addf %30, %32 : vector<64x128xf32>
    %cst_18 = arith.constant 0.000000e+00 : f32
    %34 = vector.broadcast %cst_18 : f32 to vector<64x128xf32>
    %35 = arith.maximumf %33, %34 : vector<64x128xf32>
    %cst_19 = arith.constant 0.899999976 : f32
    %36 = vector.broadcast %cst_19 : f32 to vector<64x128xf32>
    %37 = arith.mulf %36, %21 : vector<64x128xf32>
    %cst_20 = arith.constant 1.000000e-01 : f32
    %38 = vector.broadcast %cst_20 : f32 to vector<64x128xf32>
    %39 = arith.mulf %38, %35 : vector<64x128xf32>
    %40 = arith.addf %37, %39 : vector<64x128xf32>
    %41 = arith.truncf %40 : vector<64x128xf32> to vector<64x128xbf16>
    %c0_21 = arith.constant 0 : index
    %c0_22 = arith.constant 0 : index
    %42 = vector.load %arg6[%c0_21, %c0_22] : memref<128x128xbf16, #tpu.memory_space<vmem>>, vector<128x128xbf16>
    %cst_23 = arith.constant dense<0.000000e+00> : vector<64x128xf32>
    %43 = tpu.matmul %41, %42, %cst_23 {dimension_numbers = #tpu.dot_dimension_numbers<[1], [0], [0], [1], [0, 0, 1, 1], [], []>} : vector<64x128xbf16>, vector<128x128xbf16>, vector<64x128xf32> -> vector<64x128xf32>
    %44 = vector.broadcast %7 : vector<64x1xf32> to vector<64x128xf32>
    %45 = arith.mulf %44, %43 : vector<64x128xf32>
    %46 = arith.truncf %45 : vector<64x128xf32> to vector<64x128xbf16>
    %cst_24 = arith.constant dense<0.000000e+00> : vector<64x128xf32>
    %47 = tpu.matmul %0, %46, %cst_24 {dimension_numbers = #tpu.dot_dimension_numbers<[1], [0], [0], [1], [0, 0, 1, 1], [], []>} : vector<64x64xbf16>, vector<64x128xbf16>, vector<64x128xf32> -> vector<64x128xf32>
    %48 = vector.broadcast %7 : vector<64x1xf32> to vector<64x128xf32>
    %49 = arith.mulf %48, %47 : vector<64x128xf32>
    %c0_25 = arith.constant 0 : index
    %c0_26 = arith.constant 0 : index
    %50 = vector.load %arg7[%c0_25, %c0_26] : memref<1x128xf32, #tpu.memory_space<vmem>>, vector<1x128xf32>
    %51 = vector.broadcast %50 : vector<1x128xf32> to vector<64x128xf32>
    %52 = arith.addf %49, %51 : vector<64x128xf32>
    %c0_27 = arith.constant 0 : index
    %c0_28 = arith.constant 0 : index
    %53 = vector.load %arg8[%c0_27, %c0_28] : memref<64x128xf32, #tpu.memory_space<vmem>>, vector<64x128xf32>
    tpu.vector_store %arg8[%c0_27, %c0_28], %52 {strides = array<i32>} : memref<64x128xf32, #tpu.memory_space<vmem>>, vector<64x128xf32>,
    return
  }
}

</mosaic_0001>

<llo_original>
// kernel: tpu_custom_call.1
$region0: #{tpu_custom_call.1}
  #allocation0 [shape = 'u32[]', space=smem, size = 0x4, offset = 0x4, fixed_abs, tag = 'smem constant byte address 0x4 - core index']
  #allocation1 [shape = 'u32[144,128]{1,0:T(1,128)}', space=vmem, size = 0x12000, scoped, tag = 'internal scratch']
  %s0 = inlined_call_operand.hbm [shape: bf16[64,64], index: 0, kind: input, shape index: {}]
  %s1 = inlined_call_operand.hbm [shape: f32[64,128], index: 1, kind: input, shape index: {}]
  %s2 = inlined_call_operand.hbm [shape: bf16[128,128], index: 2, kind: input, shape index: {}]
  %s3 = inlined_call_operand.vmem [shape: f32[1,128], index: 3, kind: input, shape index: {}]
  %s4 = inlined_call_operand.hbm [shape: bf16[128,128], index: 4, kind: input, shape index: {}]
  %s5 = inlined_call_operand.vmem [shape: f32[1,128], index: 5, kind: input, shape index: {}]
  %s6 = inlined_call_operand.hbm [shape: bf16[128,128], index: 6, kind: input, shape index: {}]
  %s7 = inlined_call_operand.vmem [shape: f32[1,128], index: 7, kind: input, shape index: {}]
  %s8 = inlined_call_operand.hbm [shape: f32[64,128], index: 8, kind: output, shape index: {}]
  %s9 = sld [smem:[#allocation0]]
  $region62: #{tpu_custom_call.1} parent=0
    _
  %s11 = ssub.s32 1, %s9
  %s12 = scalar_select 0, %s11, %s9
  $region1: #{tpu_custom_call.1} parent=0
    #allocation2 [shape = 'u8[16384]{0}', space=vmem, size = 0x4000, scoped, tag = 'input window, operand 0, single buffered']
    #allocation3 [shape = 's32[1]{0}', space=sflag, size = 0x4, scoped, tag = 'scoped memory for tpu_custom_call.1']
    #allocation4 [shape = 's32[1]{0}', space=sflag, size = 0x4, scoped, tag = 'scoped memory for tpu_custom_call.1']
    #allocation5 [shape = 'u8[32768]{0}', space=vmem, size = 0x8000, scoped, tag = 'input window, operand 1, single buffered']
    #allocation6 [shape = 's32[1]{0}', space=sflag, size = 0x4, scoped, tag = 'scoped memory for tpu_custom_call.1']
    #allocation7 [shape = 'u8[32768]{0}', space=vmem, size = 0x8000, scoped, tag = 'input window, operand 2, single buffered']
    #allocation8 [shape = 'u8[32768]{0}', space=vmem, size = 0x8000, scoped, tag = 'input window, operand 4, single buffered']
    #allocation9 [shape = 's32[1]{0}', space=sflag, size = 0x4, scoped, tag = 'scoped memory for tpu_custom_call.1']
    #allocation10 [shape = 'u8[32768]{0}', space=vmem, size = 0x8000, scoped, tag = 'input window, operand 6, single buffered']
    #allocation11 [shape = 'u8[32768]{0}', space=vmem, size = 0x8000, scoped, tag = 'output window, operand 0, single buffered']
    %13 = vsyncpa [#allocation3], 0
    %14 = vsyncpa [#allocation6], 0
    %15 = vsyncpa [#allocation9], 0
    %16 = vsyncpa [#allocation4], 0
    // Predicated region
    $region2: #{tpu_custom_call.1} parent=1 // pred_check
      _
    $region3: #{tpu_custom_call.1} parent=1 // pred_check_branch
      %18 = sbr.rel (0) target = $region5
    $region4: #{tpu_custom_call.1} parent=1 // pred_region
      %s20 = ssub.s32 512, 512
      %21 = vsyncadd [#allocation3], %s20
      %s22 = sshll.u32 [#allocation2], 4
      %s23 = int_to_ptr.vmem [resolvable:$true] %s22
      %28 = dma.hbm_to_vmem [thread:$0]  %s0, 512, %s23, [#allocation3], 64, 64, 4
    $region5: #{tpu_custom_call.1} parent=1 // pred_fallthru
      _
    // Predicated region
    $region6: #{tpu_custom_call.1} parent=1 // pred_check
      _
    $region7: #{tpu_custom_call.1} parent=1 // pred_check_branch
      %30 = sbr.rel (0) target = $region9
    $region8: #{tpu_custom_call.1} parent=1 // pred_region
      %s32 = ssub.s32 1024, 1024
      %33 = vsyncadd [#allocation6], %s32
      %s34 = sshll.u32 [#allocation5], 4
      %s35 = int_to_ptr.vmem [resolvable:$true] %s34
      %40 = dma.hbm_to_vmem [thread:$0]  %s1, 1024, %s35, [#allocation6], 128, 128, 8
    $region9: #{tpu_custom_call.1} parent=1 // pred_fallthru
      _
    // Predicated region
    $region10: #{tpu_custom_call.1} parent=1 // pred_check
      _
    $region11: #{tpu_custom_call.1} parent=1 // pred_check_branch
      %42 = sbr.rel (0) target = $region13
    $region12: #{tpu_custom_call.1} parent=1 // pred_region
      %s44 = ssub.s32 1024, 1024
      %45 = vsyncadd [#allocation6], %s44
      %s46 = sshll.u32 [#allocation7], 4
      %s47 = int_to_ptr.vmem [resolvable:$true] %s46
      %52 = dma.hbm_to_vmem [thread:$0]  %s2, 1024, %s47, [#allocation6], 64, 64, 4
    $region13: #{tpu_custom_call.1} parent=1 // pred_fallthru
      _
    // Predicated region
    $region14: #{tpu_custom_call.1} parent=1 // pred_check
      _
    $region15: #{tpu_custom_call.1} parent=1 // pred_check_branch
      %54 = sbr.rel (0) target = $region17
    $region16: #{tpu_custom_call.1} parent=1 // pred_region
      _
    $region17: #{tpu_custom_call.1} parent=1 // pred_fallthru
      _
    // Predicated region
    $region18: #{tpu_custom_call.1} parent=1 // pred_check
      _
    $region19: #{tpu_custom_call.1} parent=1 // pred_check_branch
      %56 = sbr.rel (0) target = $region21
    $region20: #{tpu_custom_call.1} parent=1 // pred_region
      %s58 = ssub.s32 1024, 1024
      %59 = vsyncadd [#allocation9], %s58
      %s60 = sshll.u32 [#allocation8], 4
      %s61 = int_to_ptr.vmem [resolvable:$true] %s60
      %66 = dma.hbm_to_vmem [thread:$0]  %s4, 1024, %s61, [#allocation9], 64, 64, 4
    $region21: #{tpu_custom_call.1} parent=1 // pred_fallthru
      _
    // Predicated region
    $region22: #{tpu_custom_call.1} parent=1 // pred_check
      _
    $region23: #{tpu_custom_call.1} parent=1 // pred_check_branch
      %68 = sbr.rel (0) target = $region25
    $region24: #{tpu_custom_call.1} parent=1 // pred_region
      _
    $region25: #{tpu_custom_call.1} parent=1 // pred_fallthru
      _
    // Predicated region
    $region26: #{tpu_custom_call.1} parent=1 // pred_check
      _
    $region27: #{tpu_custom_call.1} parent=1 // pred_check_branch
      %70 = sbr.rel (0) target = $region29
    $region28: #{tpu_custom_call.1} parent=1 // pred_region
      %s72 = ssub.s32 1024, 1024
      %73 = vsyncadd [#allocation9], %s72
      %s74 = sshll.u32 [#allocation10], 4
      %s75 = int_to_ptr.vmem [resolvable:$true] %s74
      %80 = dma.hbm_to_vmem [thread:$0]  %s6, 1024, %s75, [#allocation9], 64, 64, 4
    $region29: #{tpu_custom_call.1} parent=1 // pred_fallthru
      _
    // Predicated region
    $region30: #{tpu_custom_call.1} parent=1 // pred_check
      _
    $region31: #{tpu_custom_call.1} parent=1 // pred_check_branch
      %82 = sbr.rel (0) target = $region33
    $region32: #{tpu_custom_call.1} parent=1 // pred_region
      _
    $region33: #{tpu_custom_call.1} parent=1 // pred_fallthru
      _
    // Predicated region
    $region34: #{tpu_custom_call.1} parent=1 // pred_check
      _
    $region35: #{tpu_custom_call.1} parent=1 // pred_check_branch
      %84 = sbr.rel (0) target = $region37
    $region36: #{tpu_custom_call.1} parent=1 // pred_region
      %85 = dma.done [#allocation3], 512
    $region37: #{tpu_custom_call.1} parent=1 // pred_fallthru
      _
    // Predicated region
    $region38: #{tpu_custom_call.1} parent=1 // pred_check
      _
    $region39: #{tpu_custom_call.1} parent=1 // pred_check_branch
      %87 = sbr.rel (0) target = $region41
    $region40: #{tpu_custom_call.1} parent=1 // pred_region
      %88 = dma.done [#allocation6], 1024
    $region41: #{tpu_custom_call.1} parent=1 // pred_fallthru
      _
    // Predicated region
    $region42: #{tpu_custom_call.1} parent=1 // pred_check
      _
    $region43: #{tpu_custom_call.1} parent=1 // pred_check_branch
      %90 = sbr.rel (0) target = $region45
    $region44: #{tpu_custom_call.1} parent=1 // pred_region
      %91 = dma.done [#allocation6], 1024
    $region45: #{tpu_custom_call.1} parent=1 // pred_fallthru
      _
    // Predicated region
    $region46: #{tpu_custom_call.1} parent=1 // pred_check
      _
    $region47: #{tpu_custom_call.1} parent=1 // pred_check_branch
      %93 = sbr.rel (0) target = $region49
    $region48: #{tpu_custom_call.1} parent=1 // pred_region
      %94 = dma.done [#allocation9], 1024
    $region49: #{tpu_custom_call.1} parent=1 // pred_fallthru
      _
    // Predicated region
    $region50: #{tpu_custom_call.1} parent=1 // pred_check
      _
    $region51: #{tpu_custom_call.1} parent=1 // pred_check_branch
      %96 = sbr.rel (0) target = $region53
    $region52: #{tpu_custom_call.1} parent=1 // pred_region
      %97 = dma.done [#allocation9], 1024
    $region53: #{tpu_custom_call.1} parent=1 // pred_fallthru
      _
    %v100 = vld [vmem:[#allocation2] sm:$0xf]
    %v101 = vld [vmem:[#allocation2 + $0x4] sm:$0xf]
    %v102 = vld [vmem:[#allocation2 + $0x8] sm:$0xf]
    %v103 = vld [vmem:[#allocation2 + $0xc] sm:$0xf]
    %v104 = vld [vmem:[#allocation2 + $0x10] sm:$0xf]
    %v105 = vld [vmem:[#allocation2 + $0x14] sm:$0xf]
    %v106 = vld [vmem:[#allocation2 + $0x18] sm:$0xf]
    %v107 = vld [vmem:[#allocation2 + $0x1c] sm:$0xf]
    %v108 = vld [vmem:[#allocation5] sm:$0xff]
    %v109 = vld [vmem:[#allocation5 + $0x8] sm:$0xff]
    %v110 = vld [vmem:[#allocation5 + $0x10] sm:$0xff]
    %v111 = vld [vmem:[#allocation5 + $0x18] sm:$0xff]
    %v112 = vld [vmem:[#allocation5 + $0x20] sm:$0xff]
    %v113 = vld [vmem:[#allocation5 + $0x28] sm:$0xff]
    %v114 = vld [vmem:[#allocation5 + $0x30] sm:$0xff]
    %v115 = vld [vmem:[#allocation5 + $0x38] sm:$0xff]
    %v124 = vunpack.c.l.b16 %v100
    %v125 = vunpack.c.l.b16 %v101
    %v126 = vunpack.c.l.b16 %v102
    %v127 = vunpack.c.l.b16 %v103
    %v128 = vunpack.c.l.b16 %v104
    %v129 = vunpack.c.l.b16 %v105
    %v130 = vunpack.c.l.b16 %v106
    %v131 = vunpack.c.l.b16 %v107
    %v132 = vpack.c.b16 %v125, %v124
    %v133 = vpack.c.b16 %v127, %v126
    %v134 = vpack.c.b16 %v129, %v128
    %v135 = vpack.c.b16 %v131, %v130
    %vm136 = vcmask 523264
    %v138 = vsel %vm136, %v132, 0
    %v141 = vsel %vm136, %v133, 0
    %v144 = vsel %vm136, %v134, 0
    %v147 = vsel %vm136, %v135, 0
    %149 = vmatprep.subr.bf16.mxu0 0
    %150 = vmatpush1.bf16.msra.mxu0 0
    %151 = vmatprep.subr.bf16.mxu0 0
    %152 = vmatpush1.bf16.msra.mxu0 0
    %153 = vmatprep.subr.bf16.mxu0 0
    %154 = vmatpush1.bf16.msra.mxu0 0
    %155 = vmatprep.subr.bf16.mxu0 0
    %156 = vmatpush1.bf16.msra.mxu0 0
    %157 = vmatprep.subr.bf16.mxu0 0
    %158 = vmatpush1.bf16.msra.mxu0 1065369472
    %159 = vmatprep.subr.bf16.mxu0 0
    %160 = vmatpush1.bf16.msra.mxu0 1065369472
    %161 = vmatprep.subr.bf16.mxu0 0
    %162 = vmatpush1.bf16.msra.mxu0 1065369472
    %163 = vmatprep.subr.bf16.mxu0 0
    %164 = vmatpush1.bf16.msra.mxu0 1065369472
    %165 = vmatprep.subr.bf16.mxu0 0
    %166 = vmatpush2.bf16.msra.mxu0 0
    %167 = vmatprep.subr.bf16.mxu0 0
    %168 = vmatpush2.bf16.msra.mxu0 0
    %169 = vmatprep.subr.bf16.mxu0 0
    %170 = vmatpush2.bf16.msra.mxu0 0
    %171 = vmatprep.subr.bf16.mxu0 0
    %172 = vmatpush2.bf16.msra.mxu0 0
    %173 = vmatprep.subr.bf16.mxu0 0
    %174 = vmatpush2.bf16.msra.mxu0 0
    %175 = vmatprep.subr.bf16.mxu0 0
    %176 = vmatpush2.bf16.msra.mxu0 0
    %177 = vmatprep.subr.bf16.mxu0 0
    %178 = vmatpush2.bf16.msra.mxu0 0
    %179 = vmatprep.subr.bf16.mxu0 0
    %180 = vmatpush2.bf16.msra.mxu0 0
    %181 = vmatprep.mubr.bf16.mxu0 0
    %182 = vmatmul.mubr.bf16.gmra.mxu0 %v138
    %v183 = vpop.f32.mrf.mxu0
    %v184 = vadd.f32 0.0, %v183
    %v185 = vpop.f32.mrf.mxu0
    %v186 = vpop.f32.mrf.mxu0
    %v187 = vadd.f32 0.0, %v186
    %v188 = vpop.f32.mrf.mxu0
    %189 = vmatprep.mubr.bf16.mxu0 0
    %190 = vmatmul.mubr.bf16.gmra.mxu0 %v141
    %v191 = vpop.f32.mrf.mxu0
    %v192 = vadd.f32 0.0, %v191
    %v193 = vpop.f32.mrf.mxu0
    %v194 = vpop.f32.mrf.mxu0
    %v195 = vadd.f32 0.0, %v194
    %v196 = vpop.f32.mrf.mxu0
    %197 = vmatprep.mubr.bf16.mxu0 0
    %198 = vmatmul.mubr.bf16.gmra.mxu0 %v144
    %v199 = vpop.f32.mrf.mxu0
    %v200 = vadd.f32 0.0, %v199
    %v201 = vpop.f32.mrf.mxu0
    %v202 = vpop.f32.mrf.mxu0
    %v203 = vadd.f32 0.0, %v202
    %v204 = vpop.f32.mrf.mxu0
    %205 = vmatprep.mubr.bf16.mxu0 0
    %206 = vmatmul.mubr.bf16.gmra.mxu0 %v147
    %v207 = vpop.f32.mrf.mxu0
    %v208 = vadd.f32 0.0, %v207
    %v209 = vpop.f32.mrf.mxu0
    %v210 = vpop.f32.mrf.mxu0
    %v211 = vadd.f32 0.0, %v210
    %v212 = vpop.f32.mrf.mxu0
    %213 = vdwg.mxu0
    %v214 = vmax.f32 %v184, 1e-12
    %v215 = vmax.f32 %v187, 1e-12
    %v216 = vmax.f32 %v192, 1e-12
    %v217 = vmax.f32 %v195, 1e-12
    %v218 = vmax.f32 %v200, 1e-12
    %v219 = vmax.f32 %v203, 1e-12
    %v220 = vmax.f32 %v208, 1e-12
    %v221 = vmax.f32 %v211, 1e-12
    %v222 = vrsqrt.pop %v214
    %v223 = vrsqrt.pop %v215
    %v224 = vrsqrt.pop %v216
    %v225 = vrsqrt.pop %v217
    %v226 = vrsqrt.pop %v218
    %v227 = vrsqrt.pop %v219
    %v228 = vrsqrt.pop %v220
    %v229 = vrsqrt.pop %v221
    %231 = vset.pattern.permute.xlu0 0
    %232 = vperm.xlu0 %231, %v222
    %v233 = vpop.permute.xlu0 %232
    %236 = vset.pattern.permute.xlu0 0
    %237 = vperm.xlu0 %236, %v223
    %v238 = vpop.permute.xlu0 %237
    %241 = vset.pattern.permute.xlu0 0
    %242 = vperm.xlu0 %241, %v224
    %v243 = vpop.permute.xlu0 %242
    %246 = vset.pattern.permute.xlu0 0
    %247 = vperm.xlu0 %246, %v225
    %v248 = vpop.permute.xlu0 %247
    %251 = vset.pattern.permute.xlu0 0
    %252 = vperm.xlu0 %251, %v226
    %v253 = vpop.permute.xlu0 %252
    %256 = vset.pattern.permute.xlu0 0
    %257 = vperm.xlu0 %256, %v227
    %v258 = vpop.permute.xlu0 %257
    %261 = vset.pattern.permute.xlu0 0
    %262 = vperm.xlu0 %261, %v228
    %v263 = vpop.permute.xlu0 %262
    %266 = vset.pattern.permute.xlu0 0
    %267 = vperm.xlu0 %266, %v229
    %v268 = vpop.permute.xlu0 %267
    %v270 = vmul.f32 %v233, %v108
    %v271 = vmul.f32 %v238, %v109
    %v272 = vmul.f32 %v243, %v110
    %v273 = vmul.f32 %v248, %v111
    %v274 = vmul.f32 %v253, %v112
    %v275 = vmul.f32 %v258, %v113
    %v276 = vmul.f32 %v263, %v114
    %v277 = vmul.f32 %v268, %v115
    %v278 = vpack.c.bf16 %v271, %v270
    %v279 = vpack.c.bf16 %v273, %v272
    %v280 = vpack.c.bf16 %v275, %v274
    %v281 = vpack.c.bf16 %v277, %v276
    %282 = vmatprep.subr.bf16.mxu0 0
    %283 = vmatpush1.bf16.msra.mxu0 0
    %284 = vmatprep.subr.bf16.mxu0 0
    %285 = vmatpush1.bf16.msra.mxu0 0
    %286 = vmatprep.subr.bf16.mxu0 0
    %287 = vmatpush1.bf16.msra.mxu0 0
    %288 = vmatprep.subr.bf16.mxu0 0
    %289 = vmatpush1.bf16.msra.mxu0 0
    %290 = vmatprep.subr.bf16.mxu0 0
    %291 = vmatpush1.bf16.msra.mxu0 %v281
    %292 = vmatprep.subr.bf16.mxu0 0
    %293 = vmatpush1.bf16.msra.mxu0 %v280
    %294 = vmatprep.subr.bf16.mxu0 0
    %295 = vmatpush1.bf16.msra.mxu0 %v279
    %296 = vmatprep.subr.bf16.mxu0 0
    %297 = vmatpush1.bf16.msra.mxu0 %v278
    %298 = vmatprep.subr.bf16.mxu0 0
    %299 = vmatpush2.bf16.msra.mxu0 0
    %300 = vmatprep.subr.bf16.mxu0 0
    %301 = vmatpush2.bf16.msra.mxu0 0
    %302 = vmatprep.subr.bf16.mxu0 0
    %303 = vmatpush2.bf16.msra.mxu0 0
    %304 = vmatprep.subr.bf16.mxu0 0
    %305 = vmatpush2.bf16.msra.mxu0 0
    %306 = vmatprep.subr.bf16.mxu0 0
    %307 = vmatpush2.bf16.msra.mxu0 0
    %308 = vmatprep.subr.bf16.mxu0 0
    %309 = vmatpush2.bf16.msra.mxu0 0
    %310 = vmatprep.subr.bf16.mxu0 0
    %311 = vmatpush2.bf16.msra.mxu0 0
    %312 = vmatprep.subr.bf16.mxu0 0
    %313 = vmatpush2.bf16.msra.mxu0 0
    %314 = vmatprep.mubr.bf16.mxu0 0
    %315 = vmatmul.mubr.bf16.gmra.mxu0 %v138
    %v316 = vpop.f32.mrf.mxu0
    %v317 = vadd.f32 0.0, %v316
    %v318 = vpop.f32.mrf.mxu0
    %v319 = vpop.f32.mrf.mxu0
    %v320 = vadd.f32 0.0, %v319
    %v321 = vpop.f32.mrf.mxu0
    %322 = vmatprep.mubr.bf16.mxu0 0
    %323 = vmatmul.mubr.bf16.gmra.mxu0 %v141
    %v324 = vpop.f32.mrf.mxu0
    %v325 = vadd.f32 0.0, %v324
    %v326 = vpop.f32.mrf.mxu0
    %v327 = vpop.f32.mrf.mxu0
    %v328 = vadd.f32 0.0, %v327
    %v329 = vpop.f32.mrf.mxu0
    %330 = vmatprep.mubr.bf16.mxu0 0
    %331 = vmatmul.mubr.bf16.gmra.mxu0 %v144
    %v332 = vpop.f32.mrf.mxu0
    %v333 = vadd.f32 0.0, %v332
    %v334 = vpop.f32.mrf.mxu0
    %v335 = vpop.f32.mrf.mxu0
    %v336 = vadd.f32 0.0, %v335
    %v337 = vpop.f32.mrf.mxu0
    %338 = vmatprep.mubr.bf16.mxu0 0
    %339 = vmatmul.mubr.bf16.gmra.mxu0 %v147
    %v340 = vpop.f32.mrf.mxu0
    %v341 = vadd.f32 0.0, %v340
    %v342 = vpop.f32.mrf.mxu0
    %v343 = vpop.f32.mrf.mxu0
    %v344 = vadd.f32 0.0, %v343
    %v345 = vpop.f32.mrf.mxu0
    %346 = vdwg.mxu0
    %v347 = vmul.f32 %v233, %v317
    %v348 = vmul.f32 %v238, %v320
    %v349 = vmul.f32 %v243, %v325
    %v350 = vmul.f32 %v248, %v328
    %v351 = vmul.f32 %v253, %v333
    %v352 = vmul.f32 %v258, %v336
    %v353 = vmul.f32 %v263, %v341
    %v354 = vmul.f32 %v268, %v344
    %v355 = vpack.c.bf16 %v348, %v347
    %v356 = vpack.c.bf16 %v350, %v349
    %v357 = vpack.c.bf16 %v352, %v351
    %v358 = vpack.c.bf16 %v354, %v353
    %v359 = vld [vmem:[#allocation7] sm:$0xf]
    %v360 = vld [vmem:[#allocation7 + $0x4] sm:$0xf]
    %v361 = vld [vmem:[#allocation7 + $0x8] sm:$0xf]
    %v362 = vld [vmem:[#allocation7 + $0xc] sm:$0xf]
    %v363 = vld [vmem:[#allocation7 + $0x10] sm:$0xf]
    %v364 = vld [vmem:[#allocation7 + $0x14] sm:$0xf]
    %v365 = vld [vmem:[#allocation7 + $0x18] sm:$0xf]
    %v366 = vld [vmem:[#allocation7 + $0x1c] sm:$0xf]
    %v367 = vld [vmem:[#allocation7 + $0x20] sm:$0xf]
    %v368 = vld [vmem:[#allocation7 + $0x24] sm:$0xf]
    %v369 = vld [vmem:[#allocation7 + $0x28] sm:$0xf]
    %v370 = vld [vmem:[#allocation7 + $0x2c] sm:$0xf]
    %v371 = vld [vmem:[#allocation7 + $0x30] sm:$0xf]
    %v372 = vld [vmem:[#allocation7 + $0x34] sm:$0xf]
    %v373 = vld [vmem:[#allocation7 + $0x38] sm:$0xf]
    %v374 = vld [vmem:[#allocation7 + $0x3c] sm:$0xf]
    %v375 = vld [vmem:[%s3] sm:$0x1]
    %v377 = vlaneseq
    %v378 = vshrl.u32 %v377, 7
    %v379 = vsub.s32 0, %v378
    %v380 = vrot.slane %v375, %v379
    %v398 = vunpack.c.l.b16 %v359
    %v399 = vunpack.c.l.b16 %v360
    %v400 = vunpack.c.l.b16 %v361
    %v401 = vunpack.c.l.b16 %v362
    %v402 = vunpack.c.l.b16 %v363
    %v403 = vunpack.c.l.b16 %v364
    %v404 = vunpack.c.l.b16 %v365
    %v405 = vunpack.c.l.b16 %v366
    %v406 = vunpack.c.l.b16 %v367
    %v407 = vunpack.c.l.b16 %v368
    %v408 = vunpack.c.l.b16 %v369
    %v409 = vunpack.c.l.b16 %v370
    %v410 = vunpack.c.l.b16 %v371
    %v411 = vunpack.c.l.b16 %v372
    %v412 = vunpack.c.l.b16 %v373
    %v413 = vunpack.c.l.b16 %v374
    %v414 = vpack.c.b16 %v399, %v398
    %v415 = vpack.c.b16 %v401, %v400
    %v416 = vpack.c.b16 %v403, %v402
    %v417 = vpack.c.b16 %v405, %v404
    %v418 = vpack.c.b16 %v407, %v406
    %v419 = vpack.c.b16 %v409, %v408
    %v420 = vpack.c.b16 %v411, %v410
    %v421 = vpack.c.b16 %v413, %v412
    %430 = vmatprep.subr.bf16.mxu0 0
    %431 = vmatpush1.bf16.msra.mxu0 %v421
    %432 = vmatprep.subr.bf16.mxu0 0
    %433 = vmatpush1.bf16.msra.mxu0 %v420
    %434 = vmatprep.subr.bf16.mxu0 0
    %435 = vmatpush1.bf16.msra.mxu0 %v419
    %436 = vmatprep.subr.bf16.mxu0 0
    %437 = vmatpush1.bf16.msra.mxu0 %v418
    %438 = vmatprep.subr.bf16.mxu0 0
    %439 = vmatpush1.bf16.msra.mxu0 %v417
    %440 = vmatprep.subr.bf16.mxu0 0
    %441 = vmatpush1.bf16.msra.mxu0 %v416
    %442 = vmatprep.subr.bf16.mxu0 0
    %443 = vmatpush1.bf16.msra.mxu0 %v415
    %444 = vmatprep.subr.bf16.mxu0 0
    %445 = vmatpush1.bf16.msra.mxu0 %v414
    %446 = vmatprep.subr.bf16.mxu0 0
    %447 = vmatpush2.bf16.msra.mxu0 0
    %448 = vmatprep.subr.bf16.mxu0 0
    %449 = vmatpush2.bf16.msra.mxu0 0
    %450 = vmatprep.subr.bf16.mxu0 0
    %451 = vmatpush2.bf16.msra.mxu0 0
    %452 = vmatprep.subr.bf16.mxu0 0
    %453 = vmatpush2.bf16.msra.mxu0 0
    %454 = vmatprep.subr.bf16.mxu0 0
    %455 = vmatpush2.bf16.msra.mxu0 0
    %456 = vmatprep.subr.bf16.mxu0 0
    %457 = vmatpush2.bf16.msra.mxu0 0
    %458 = vmatprep.subr.bf16.mxu0 0
    %459 = vmatpush2.bf16.msra.mxu0 0
    %460 = vmatprep.subr.bf16.mxu0 0
    %461 = vmatpush2.bf16.msra.mxu0 0
    %462 = vmatprep.mubr.bf16.mxu0 0
    %463 = vmatmul.mubr.bf16.gmra.mxu0 %v355
    %v464 = vpop.f32.mrf.mxu0
    %v465 = vadd.f32 %v380, %v464
    %v466 = vpop.f32.mrf.mxu0
    %v467 = vpop.f32.mrf.mxu0
    %v468 = vadd.f32 %v380, %v467
    %v469 = vpop.f32.mrf.mxu0
    %470 = vmatprep.mubr.bf16.mxu0 0
    %471 = vmatmul.mubr.bf16.gmra.mxu0 %v356
    %v472 = vpop.f32.mrf.mxu0
    %v473 = vadd.f32 %v380, %v472
    %v474 = vpop.f32.mrf.mxu0
    %v475 = vpop.f32.mrf.mxu0
    %v476 = vadd.f32 %v380, %v475
    %v477 = vpop.f32.mrf.mxu0
    %478 = vmatprep.mubr.bf16.mxu0 0
    %479 = vmatmul.mubr.bf16.gmra.mxu0 %v357
    %v480 = vpop.f32.mrf.mxu0
    %v481 = vadd.f32 %v380, %v480
    %v482 = vpop.f32.mrf.mxu0
    %v483 = vpop.f32.mrf.mxu0
    %v484 = vadd.f32 %v380, %v483
    %v485 = vpop.f32.mrf.mxu0
    %486 = vmatprep.mubr.bf16.mxu0 0
    %487 = vmatmul.mubr.bf16.gmra.mxu0 %v358
    %v488 = vpop.f32.mrf.mxu0
    %v489 = vadd.f32 %v380, %v488
    %v490 = vpop.f32.mrf.mxu0
    %v491 = vpop.f32.mrf.mxu0
    %v492 = vadd.f32 %v380, %v491
    %v493 = vpop.f32.mrf.mxu0
    %494 = vdwg.mxu0
    %v495 = vmax.f32 %v465, 0.0
    %v496 = vmax.f32 %v468, 0.0
    %v497 = vmax.f32 %v473, 0.0
    %v498 = vmax.f32 %v476, 0.0
    %v499 = vmax.f32 %v481, 0.0
    %v500 = vmax.f32 %v484, 0.0
    %v501 = vmax.f32 %v489, 0.0
    %v502 = vmax.f32 %v492, 0.0
    %v503 = vpack.c.bf16 %v496, %v495
    %v504 = vpack.c.bf16 %v498, %v497
    %v505 = vpack.c.bf16 %v500, %v499
    %v506 = vpack.c.bf16 %v502, %v501
    %v507 = vld [vmem:[#allocation8] sm:$0xf]
    %v508 = vld [vmem:[#allocation8 + $0x4] sm:$0xf]
    %v509 = vld [vmem:[#allocation8 + $0x8] sm:$0xf]
    %v510 = vld [vmem:[#allocation8 + $0xc] sm:$0xf]
    %v511 = vld [vmem:[#allocation8 + $0x10] sm:$0xf]
    %v512 = vld [vmem:[#allocation8 + $0x14] sm:$0xf]
    %v513 = vld [vmem:[#allocation8 + $0x18] sm:$0xf]
    %v514 = vld [vmem:[#allocation8 + $0x1c] sm:$0xf]
    %v515 = vld [vmem:[#allocation8 + $0x20] sm:$0xf]
    %v516 = vld [vmem:[#allocation8 + $0x24] sm:$0xf]
    %v517 = vld [vmem:[#allocation8 + $0x28] sm:$0xf]
    %v518 = vld [vmem:[#allocation8 + $0x2c] sm:$0xf]
    %v519 = vld [vmem:[#allocation8 + $0x30] sm:$0xf]
    %v520 = vld [vmem:[#allocation8 + $0x34] sm:$0xf]
    %v521 = vld [vmem:[#allocation8 + $0x38] sm:$0xf]
    %v522 = vld [vmem:[#allocation8 + $0x3c] sm:$0xf]
    %v539 = vunpack.c.l.b16 %v507
    %v540 = vunpack.c.l.b16 %v508
    %v541 = vunpack.c.l.b16 %v509
    %v542 = vunpack.c.l.b16 %v510
    %v543 = vunpack.c.l.b16 %v511
    %v544 = vunpack.c.l.b16 %v512
    %v545 = vunpack.c.l.b16 %v513
    %v546 = vunpack.c.l.b16 %v514
    %v547 = vunpack.c.l.b16 %v515
    %v548 = vunpack.c.l.b16 %v516
    %v549 = vunpack.c.l.b16 %v517
    %v550 = vunpack.c.l.b16 %v518
    %v551 = vunpack.c.l.b16 %v519
    %v552 = vunpack.c.l.b16 %v520
    %v553 = vunpack.c.l.b16 %v521
    %v554 = vunpack.c.l.b16 %v522
    %v555 = vpack.c.b16 %v540, %v539
    %v556 = vpack.c.b16 %v542, %v541
    %v557 = vpack.c.b16 %v544, %v543
    %v558 = vpack.c.b16 %v546, %v545
    %v559 = vpack.c.b16 %v548, %v547
    %v560 = vpack.c.b16 %v550, %v549
    %v561 = vpack.c.b16 %v552, %v551
    %v562 = vpack.c.b16 %v554, %v553
    %571 = vmatprep.subr.bf16.mxu0 0
    %572 = vmatpush1.bf16.msra.mxu0 %v562
    %573 = vmatprep.subr.bf16.mxu0 0
    %574 = vmatpush1.bf16.msra.mxu0 %v561
    %575 = vmatprep.subr.bf16.mxu0 0
    %576 = vmatpush1.bf16.msra.mxu0 %v560
    %577 = vmatprep.subr.bf16.mxu0 0
    %578 = vmatpush1.bf16.msra.mxu0 %v559
    %579 = vmatprep.subr.bf16.mxu0 0
    %580 = vmatpush1.bf16.msra.mxu0 %v558
    %581 = vmatprep.subr.bf16.mxu0 0
    %582 = vmatpush1.bf16.msra.mxu0 %v557
    %583 = vmatprep.subr.bf16.mxu0 0
    %584 = vmatpush1.bf16.msra.mxu0 %v556
    %585 = vmatprep.subr.bf16.mxu0 0
    %586 = vmatpush1.bf16.msra.mxu0 %v555
    %587 = vmatprep.subr.bf16.mxu0 0
    %588 = vmatpush2.bf16.msra.mxu0 0
    %589 = vmatprep.subr.bf16.mxu0 0
    %590 = vmatpush2.bf16.msra.mxu0 0
    %591 = vmatprep.subr.bf16.mxu0 0
    %592 = vmatpush2.bf16.msra.mxu0 0
    %593 = vmatprep.subr.bf16.mxu0 0
    %594 = vmatpush2.bf16.msra.mxu0 0
    %595 = vmatprep.subr.bf16.mxu0 0
    %596 = vmatpush2.bf16.msra.mxu0 0
    %597 = vmatprep.subr.bf16.mxu0 0
    %598 = vmatpush2.bf16.msra.mxu0 0
    %599 = vmatprep.subr.bf16.mxu0 0
    %600 = vmatpush2.bf16.msra.mxu0 0
    %601 = vmatprep.subr.bf16.mxu0 0
    %602 = vmatpush2.bf16.msra.mxu0 0
    %603 = vmatprep.mubr.bf16.mxu0 0
    %604 = vmatmul.mubr.bf16.gmra.mxu0 %v503
    %v605 = vpop.f32.mrf.mxu0
    %v606 = vadd.f32 0.0, %v605
    %v607 = vpop.f32.mrf.mxu0
    %v608 = vpop.f32.mrf.mxu0
    %v609 = vadd.f32 0.0, %v608
    %v610 = vpop.f32.mrf.mxu0
    %611 = vmatprep.mubr.bf16.mxu0 0
    %612 = vmatmul.mubr.bf16.gmra.mxu0 %v504
    %v613 = vpop.f32.mrf.mxu0
    %v614 = vadd.f32 0.0, %v613
    %v615 = vpop.f32.mrf.mxu0
    %v616 = vpop.f32.mrf.mxu0
    %v617 = vadd.f32 0.0, %v616
    %v618 = vpop.f32.mrf.mxu0
    %619 = vmatprep.mubr.bf16.mxu0 0
    %620 = vmatmul.mubr.bf16.gmra.mxu0 %v505
    %v621 = vpop.f32.mrf.mxu0
    %v622 = vadd.f32 0.0, %v621
    %v623 = vpop.f32.mrf.mxu0
    %v624 = vpop.f32.mrf.mxu0
    %v625 = vadd.f32 0.0, %v624
    %v626 = vpop.f32.mrf.mxu0
    %627 = vmatprep.mubr.bf16.mxu0 0
    %628 = vmatmul.mubr.bf16.gmra.mxu0 %v506
    %v629 = vpop.f32.mrf.mxu0
    %v630 = vadd.f32 0.0, %v629
    %v631 = vpop.f32.mrf.mxu0
    %v632 = vpop.f32.mrf.mxu0
    %v633 = vadd.f32 0.0, %v632
    %v634 = vpop.f32.mrf.mxu0
    %635 = vdwg.mxu0
    %v636 = vmul.f32 %v233, %v606
    %v637 = vmul.f32 %v238, %v609
    %v638 = vmul.f32 %v243, %v614
    %v639 = vmul.f32 %v248, %v617
    %v640 = vmul.f32 %v253, %v622
    %v641 = vmul.f32 %v258, %v625
    %v642 = vmul.f32 %v263, %v630
    %v643 = vmul.f32 %v268, %v633
    %v644 = vpack.c.bf16 %v637, %v636
    %v645 = vpack.c.bf16 %v639, %v638
    %v646 = vpack.c.bf16 %v641, %v640
    %v647 = vpack.c.bf16 %v643, %v642
    %648 = vmatprep.subr.bf16.mxu0 0
    %649 = vmatpush1.bf16.msra.mxu0 0
    %650 = vmatprep.subr.bf16.mxu0 0
    %651 = vmatpush1.bf16.msra.mxu0 0
    %652 = vmatprep.subr.bf16.mxu0 0
    %653 = vmatpush1.bf16.msra.mxu0 0
    %654 = vmatprep.subr.bf16.mxu0 0
    %655 = vmatpush1.bf16.msra.mxu0 0
    %656 = vmatprep.subr.bf16.mxu0 0
    %657 = vmatpush1.bf16.msra.mxu0 %v647
    %658 = vmatprep.subr.bf16.mxu0 0
    %659 = vmatpush1.bf16.msra.mxu0 %v646
    %660 = vmatprep.subr.bf16.mxu0 0
    %661 = vmatpush1.bf16.msra.mxu0 %v645
    %662 = vmatprep.subr.bf16.mxu0 0
    %663 = vmatpush1.bf16.msra.mxu0 %v644
    %664 = vmatprep.subr.bf16.mxu0 0
    %665 = vmatpush2.bf16.msra.mxu0 0
    %666 = vmatprep.subr.bf16.mxu0 0
    %667 = vmatpush2.bf16.msra.mxu0 0
    %668 = vmatprep.subr.bf16.mxu0 0
    %669 = vmatpush2.bf16.msra.mxu0 0
    %670 = vmatprep.subr.bf16.mxu0 0
    %671 = vmatpush2.bf16.msra.mxu0 0
    %672 = vmatprep.subr.bf16.mxu0 0
    %673 = vmatpush2.bf16.msra.mxu0 0
    %674 = vmatprep.subr.bf16.mxu0 0
    %675 = vmatpush2.bf16.msra.mxu0 0
    %676 = vmatprep.subr.bf16.mxu0 0
    %677 = vmatpush2.bf16.msra.mxu0 0
    %678 = vmatprep.subr.bf16.mxu0 0
    %679 = vmatpush2.bf16.msra.mxu0 0
    %680 = vmatprep.mubr.bf16.mxu0 0
    %681 = vmatmul.mubr.bf16.gmra.mxu0 %v138
    %v682 = vpop.f32.mrf.mxu0
    %v683 = vadd.f32 0.0, %v682
    %v684 = vpop.f32.mrf.mxu0
    %v685 = vpop.f32.mrf.mxu0
    %v686 = vadd.f32 0.0, %v685
    %v687 = vpop.f32.mrf.mxu0
    %688 = vmatprep.mubr.bf16.mxu0 0
    %689 = vmatmul.mubr.bf16.gmra.mxu0 %v141
    %v690 = vpop.f32.mrf.mxu0
    %v691 = vadd.f32 0.0, %v690
    %v692 = vpop.f32.mrf.mxu0
    %v693 = vpop.f32.mrf.mxu0
    %v694 = vadd.f32 0.0, %v693
    %v695 = vpop.f32.mrf.mxu0
    %696 = vmatprep.mubr.bf16.mxu0 0
    %697 = vmatmul.mubr.bf16.gmra.mxu0 %v144
    %v698 = vpop.f32.mrf.mxu0
    %v699 = vadd.f32 0.0, %v698
    %v700 = vpop.f32.mrf.mxu0
    %v701 = vpop.f32.mrf.mxu0
    %v702 = vadd.f32 0.0, %v701
    %v703 = vpop.f32.mrf.mxu0
    %704 = vmatprep.mubr.bf16.mxu0 0
    %705 = vmatmul.mubr.bf16.gmra.mxu0 %v147
    %v706 = vpop.f32.mrf.mxu0
    %v707 = vadd.f32 0.0, %v706
    %v708 = vpop.f32.mrf.mxu0
    %v709 = vpop.f32.mrf.mxu0
    %v710 = vadd.f32 0.0, %v709
    %v711 = vpop.f32.mrf.mxu0
    %712 = vdwg.mxu0
    %v713 = vmul.f32 %v233, %v683
    %v714 = vmul.f32 %v238, %v686
    %v715 = vmul.f32 %v243, %v691
    %v716 = vmul.f32 %v248, %v694
    %v717 = vmul.f32 %v253, %v699
    %v718 = vmul.f32 %v258, %v702
    %v719 = vmul.f32 %v263, %v707
    %v720 = vmul.f32 %v268, %v710
    %v721 = vld [vmem:[%s5] sm:$0x1]
    %v723 = vlaneseq
    %v724 = vshrl.u32 %v723, 7
    %v725 = vsub.s32 0, %v724
    %v726 = vrot.slane %v721, %v725
    %v728 = vadd.f32 %v713, %v726
    %v729 = vadd.f32 %v714, %v726
    %v730 = vadd.f32 %v715, %v726
    %v731 = vadd.f32 %v716, %v726
    %v732 = vadd.f32 %v717, %v726
    %v733 = vadd.f32 %v718, %v726
    %v734 = vadd.f32 %v719, %v726
    %v735 = vadd.f32 %v720, %v726
    %v736 = vmax.f32 %v728, 0.0
    %v737 = vmax.f32 %v729, 0.0
    %v738 = vmax.f32 %v730, 0.0
    %v739 = vmax.f32 %v731, 0.0
    %v740 = vmax.f32 %v732, 0.0
    %v741 = vmax.f32 %v733, 0.0
    %v742 = vmax.f32 %v734, 0.0
    %v743 = vmax.f32 %v735, 0.0
    %v744 = vmul.f32 %v495, 0.9
    %v745 = vmul.f32 %v496, 0.9
    %v746 = vmul.f32 %v497, 0.9
    %v747 = vmul.f32 %v498, 0.9
    %v748 = vmul.f32 %v499, 0.9
    %v749 = vmul.f32 %v500, 0.9
    %v750 = vmul.f32 %v501, 0.9
    %v751 = vmul.f32 %v502, 0.9
    %v752 = vmul.f32 %v736, 0.1
    %v753 = vmul.f32 %v737, 0.1
    %v754 = vmul.f32 %v738, 0.1
    %v755 = vmul.f32 %v739, 0.1
    %v756 = vmul.f32 %v740, 0.1
    %v757 = vmul.f32 %v741, 0.1
    %v758 = vmul.f32 %v742, 0.1
    %v759 = vmul.f32 %v743, 0.1
    %v760 = vadd.f32 %v744, %v752
    %v761 = vadd.f32 %v745, %v753
    %v762 = vadd.f32 %v746, %v754
    %v763 = vadd.f32 %v747, %v755
    %v764 = vadd.f32 %v748, %v756
    %v765 = vadd.f32 %v749, %v757
    %v766 = vadd.f32 %v750, %v758
    %v767 = vadd.f32 %v751, %v759
    %v768 = vpack.c.bf16 %v761, %v760
    %v769 = vpack.c.bf16 %v763, %v762
    %v770 = vpack.c.bf16 %v765, %v764
    %v771 = vpack.c.bf16 %v767, %v766
    %v772 = vld [vmem:[#allocation10] sm:$0xf]
    %v773 = vld [vmem:[#allocation10 + $0x4] sm:$0xf]
    %v774 = vld [vmem:[#allocation10 + $0x8] sm:$0xf]
    %v775 = vld [vmem:[#allocation10 + $0xc] sm:$0xf]
    %v776 = vld [vmem:[#allocation10 + $0x10] sm:$0xf]
    %v777 = vld [vmem:[#allocation10 + $0x14] sm:$0xf]
    %v778 = vld [vmem:[#allocation10 + $0x18] sm:$0xf]
    %v779 = vld [vmem:[#allocation10 + $0x1c] sm:$0xf]
    %v780 = vld [vmem:[#allocation10 + $0x20] sm:$0xf]
    %v781 = vld [vmem:[#allocation10 + $0x24] sm:$0xf]
    %v782 = vld [vmem:[#allocation10 + $0x28] sm:$0xf]
    %v783 = vld [vmem:[#allocation10 + $0x2c] sm:$0xf]
    %v784 = vld [vmem:[#allocation10 + $0x30] sm:$0xf]
    %v785 = vld [vmem:[#allocation10 + $0x34] sm:$0xf]
    %v786 = vld [vmem:[#allocation10 + $0x38] sm:$0xf]
    %v787 = vld [vmem:[#allocation10 + $0x3c] sm:$0xf]
    %v804 = vunpack.c.l.b16 %v772
    %v805 = vunpack.c.l.b16 %v773
    %v806 = vunpack.c.l.b16 %v774
    %v807 = vunpack.c.l.b16 %v775
    %v808 = vunpack.c.l.b16 %v776
    %v809 = vunpack.c.l.b16 %v777
    %v810 = vunpack.c.l.b16 %v778
    %v811 = vunpack.c.l.b16 %v779
    %v812 = vunpack.c.l.b16 %v780
    %v813 = vunpack.c.l.b16 %v781
    %v814 = vunpack.c.l.b16 %v782
    %v815 = vunpack.c.l.b16 %v783
    %v816 = vunpack.c.l.b16 %v784
    %v817 = vunpack.c.l.b16 %v785
    %v818 = vunpack.c.l.b16 %v786
    %v819 = vunpack.c.l.b16 %v787
    %v820 = vpack.c.b16 %v805, %v804
    %v821 = vpack.c.b16 %v807, %v806
    %v822 = vpack.c.b16 %v809, %v808
    %v823 = vpack.c.b16 %v811, %v810
    %v824 = vpack.c.b16 %v813, %v812
    %v825 = vpack.c.b16 %v815, %v814
    %v826 = vpack.c.b16 %v817, %v816
    %v827 = vpack.c.b16 %v819, %v818
    %836 = vmatprep.subr.bf16.mxu0 0
    %837 = vmatpush1.bf16.msra.mxu0 %v827
    %838 = vmatprep.subr.bf16.mxu0 0
    %839 = vmatpush1.bf16.msra.mxu0 %v826
    %840 = vmatprep.subr.bf16.mxu0 0
    %841 = vmatpush1.bf16.msra.mxu0 %v825
    %842 = vmatprep.subr.bf16.mxu0 0
    %843 = vmatpush1.bf16.msra.mxu0 %v824
    %844 = vmatprep.subr.bf16.mxu0 0
    %845 = vmatpush1.bf16.msra.mxu0 %v823
    %846 = vmatprep.subr.bf16.mxu0 0
    %847 = vmatpush1.bf16.msra.mxu0 %v822
    %848 = vmatprep.subr.bf16.mxu0 0
    %849 = vmatpush1.bf16.msra.mxu0 %v821
    %850 = vmatprep.subr.bf16.mxu0 0
    %851 = vmatpush1.bf16.msra.mxu0 %v820
    %852 = vmatprep.subr.bf16.mxu0 0
    %853 = vmatpush2.bf16.msra.mxu0 0
    %854 = vmatprep.subr.bf16.mxu0 0
    %855 = vmatpush2.bf16.msra.mxu0 0
    %856 = vmatprep.subr.bf16.mxu0 0
    %857 = vmatpush2.bf16.msra.mxu0 0
    %858 = vmatprep.subr.bf16.mxu0 0
    %859 = vmatpush2.bf16.msra.mxu0 0
    %860 = vmatprep.subr.bf16.mxu0 0
    %861 = vmatpush2.bf16.msra.mxu0 0
    %862 = vmatprep.subr.bf16.mxu0 0
    %863 = vmatpush2.bf16.msra.mxu0 0
    %864 = vmatprep.subr.bf16.mxu0 0
    %865 = vmatpush2.bf16.msra.mxu0 0
    %866 = vmatprep.subr.bf16.mxu0 0
    %867 = vmatpush2.bf16.msra.mxu0 0
    %868 = vmatprep.mubr.bf16.mxu0 0
    %869 = vmatmul.mubr.bf16.gmra.mxu0 %v768
    %v870 = vpop.f32.mrf.mxu0
    %v871 = vadd.f32 0.0, %v870
    %v872 = vpop.f32.mrf.mxu0
    %v873 = vpop.f32.mrf.mxu0
    %v874 = vadd.f32 0.0, %v873
    %v875 = vpop.f32.mrf.mxu0
    %876 = vmatprep.mubr.bf16.mxu0 0
    %877 = vmatmul.mubr.bf16.gmra.mxu0 %v769
    %v878 = vpop.f32.mrf.mxu0
    %v879 = vadd.f32 0.0, %v878
    %v880 = vpop.f32.mrf.mxu0
    %v881 = vpop.f32.mrf.mxu0
    %v882 = vadd.f32 0.0, %v881
    %v883 = vpop.f32.mrf.mxu0
    %884 = vmatprep.mubr.bf16.mxu0 0
    %885 = vmatmul.mubr.bf16.gmra.mxu0 %v770
    %v886 = vpop.f32.mrf.mxu0
    %v887 = vadd.f32 0.0, %v886
    %v888 = vpop.f32.mrf.mxu0
    %v889 = vpop.f32.mrf.mxu0
    %v890 = vadd.f32 0.0, %v889
    %v891 = vpop.f32.mrf.mxu0
    %892 = vmatprep.mubr.bf16.mxu0 0
    %893 = vmatmul.mubr.bf16.gmra.mxu0 %v771
    %v894 = vpop.f32.mrf.mxu0
    %v895 = vadd.f32 0.0, %v894
    %v896 = vpop.f32.mrf.mxu0
    %v897 = vpop.f32.mrf.mxu0
    %v898 = vadd.f32 0.0, %v897
    %v899 = vpop.f32.mrf.mxu0
    %900 = vdwg.mxu0
    %v901 = vmul.f32 %v233, %v871
    %v902 = vmul.f32 %v238, %v874
    %v903 = vmul.f32 %v243, %v879
    %v904 = vmul.f32 %v248, %v882
    %v905 = vmul.f32 %v253, %v887
    %v906 = vmul.f32 %v258, %v890
    %v907 = vmul.f32 %v263, %v895
    %v908 = vmul.f32 %v268, %v898
    %v909 = vpack.c.bf16 %v902, %v901
    %v910 = vpack.c.bf16 %v904, %v903
    %v911 = vpack.c.bf16 %v906, %v905
    %v912 = vpack.c.bf16 %v908, %v907
    %913 = vmatprep.subr.bf16.mxu0 0
    %914 = vmatpush1.bf16.msra.mxu0 0
    %915 = vmatprep.subr.bf16.mxu0 0
    %916 = vmatpush1.bf16.msra.mxu0 0
    %917 = vmatprep.subr.bf16.mxu0 0
    %918 = vmatpush1.bf16.msra.mxu0 0
    %919 = vmatprep.subr.bf16.mxu0 0
    %920 = vmatpush1.bf16.msra.mxu0 0
    %921 = vmatprep.subr.bf16.mxu0 0
    %922 = vmatpush1.bf16.msra.mxu0 %v912
    %923 = vmatprep.subr.bf16.mxu0 0
    %924 = vmatpush1.bf16.msra.mxu0 %v911
    %925 = vmatprep.subr.bf16.mxu0 0
    %926 = vmatpush1.bf16.msra.mxu0 %v910
    %927 = vmatprep.subr.bf16.mxu0 0
    %928 = vmatpush1.bf16.msra.mxu0 %v909
    %929 = vmatprep.subr.bf16.mxu0 0
    %930 = vmatpush2.bf16.msra.mxu0 0
    %931 = vmatprep.subr.bf16.mxu0 0
    %932 = vmatpush2.bf16.msra.mxu0 0
    %933 = vmatprep.subr.bf16.mxu0 0
    %934 = vmatpush2.bf16.msra.mxu0 0
    %935 = vmatprep.subr.bf16.mxu0 0
    %936 = vmatpush2.bf16.msra.mxu0 0
    %937 = vmatprep.subr.bf16.mxu0 0
    %938 = vmatpush2.bf16.msra.mxu0 0
    %939 = vmatprep.subr.bf16.mxu0 0
    %940 = vmatpush2.bf16.msra.mxu0 0
    %941 = vmatprep.subr.bf16.mxu0 0
    %942 = vmatpush2.bf16.msra.mxu0 0
    %943 = vmatprep.subr.bf16.mxu0 0
    %944 = vmatpush2.bf16.msra.mxu0 0
    %945 = vmatprep.mubr.bf16.mxu0 0
    %946 = vmatmul.mubr.bf16.gmra.mxu0 %v138
    %v947 = vpop.f32.mrf.mxu0
    %v948 = vadd.f32 0.0, %v947
    %v949 = vpop.f32.mrf.mxu0
    %v950 = vpop.f32.mrf.mxu0
    %v951 = vadd.f32 0.0, %v950
    %v952 = vpop.f32.mrf.mxu0
    %953 = vmatprep.mubr.bf16.mxu0 0
    %954 = vmatmul.mubr.bf16.gmra.mxu0 %v141
    %v955 = vpop.f32.mrf.mxu0
    %v956 = vadd.f32 0.0, %v955
    %v957 = vpop.f32.mrf.mxu0
    %v958 = vpop.f32.mrf.mxu0
    %v959 = vadd.f32 0.0, %v958
    %v960 = vpop.f32.mrf.mxu0
    %961 = vmatprep.mubr.bf16.mxu0 0
    %962 = vmatmul.mubr.bf16.gmra.mxu0 %v144
    %v963 = vpop.f32.mrf.mxu0
    %v964 = vadd.f32 0.0, %v963
    %v965 = vpop.f32.mrf.mxu0
    %v966 = vpop.f32.mrf.mxu0
    %v967 = vadd.f32 0.0, %v966
    %v968 = vpop.f32.mrf.mxu0
    %969 = vmatprep.mubr.bf16.mxu0 0
    %970 = vmatmul.mubr.bf16.gmra.mxu0 %v147
    %v971 = vpop.f32.mrf.mxu0
    %v972 = vadd.f32 0.0, %v971
    %v973 = vpop.f32.mrf.mxu0
    %v974 = vpop.f32.mrf.mxu0
    %v975 = vadd.f32 0.0, %v974
    %v976 = vpop.f32.mrf.mxu0
    %977 = vdwg.mxu0
    %v978 = vmul.f32 %v233, %v948
    %v979 = vmul.f32 %v238, %v951
    %v980 = vmul.f32 %v243, %v956
    %v981 = vmul.f32 %v248, %v959
    %v982 = vmul.f32 %v253, %v964
    %v983 = vmul.f32 %v258, %v967
    %v984 = vmul.f32 %v263, %v972
    %v985 = vmul.f32 %v268, %v975
    %v986 = vld [vmem:[%s7] sm:$0x1]
    %v988 = vlaneseq
    %v989 = vshrl.u32 %v988, 7
    %v990 = vsub.s32 0, %v989
    %v991 = vrot.slane %v986, %v990
    %v993 = vadd.f32 %v978, %v991
    %v994 = vadd.f32 %v979, %v991
    %v995 = vadd.f32 %v980, %v991
    %v996 = vadd.f32 %v981, %v991
    %v997 = vadd.f32 %v982, %v991
    %v998 = vadd.f32 %v983, %v991
    %v999 = vadd.f32 %v984, %v991
    %v1000 = vadd.f32 %v985, %v991
    %1001 = vst [vmem:[#allocation11] sm:$0xff] %v993
    %1002 = vst [vmem:[#allocation11 + $0x8] sm:$0xff] %v994
    %1003 = vst [vmem:[#allocation11 + $0x10] sm:$0xff] %v995
    %1004 = vst [vmem:[#allocation11 + $0x18] sm:$0xff] %v996
    %1005 = vst [vmem:[#allocation11 + $0x20] sm:$0xff] %v997
    %1006 = vst [vmem:[#allocation11 + $0x28] sm:$0xff] %v998
    %1007 = vst [vmem:[#allocation11 + $0x30] sm:$0xff] %v999
    %1008 = vst [vmem:[#allocation11 + $0x38] sm:$0xff] %v1000
    // Predicated region
    $region54: #{tpu_custom_call.1} parent=1 // pred_check
      _
    $region55: #{tpu_custom_call.1} parent=1 // pred_check_branch
      %1010 = sbr.rel (0) target = $region57
    $region56: #{tpu_custom_call.1} parent=1 // pred_region
      %s1012 = ssub.s32 1024, 1024
      %1013 = vsyncadd [#allocation4], %s1012
      %s1014 = sshll.u32 [#allocation11], 4
      %s1015 = int_to_ptr.vmem [resolvable:$true] %s1014
      %1020 = dma.vmem_to_hbm [thread:$0]  %s1015, 1024, %s8, [#allocation4], 128, 128, 8
    $region57: #{tpu_custom_call.1} parent=1 // pred_fallthru
      _
    // Predicated region
    $region58: #{tpu_custom_call.1} parent=1 // pred_check
      _
    $region59: #{tpu_custom_call.1} parent=1 // pred_check_branch
      %1022 = sbr.rel (0) target = $region61
    $region60: #{tpu_custom_call.1} parent=1 // pred_region
      %1023 = dma.done [#allocation4], 1024
    $region61: #{tpu_custom_call.1} parent=1 // pred_fallthru
      _
    %1024 = vsyncpa [#allocation3], 1
    %1025 = vsyncpa [#allocation6], 1
    %1026 = vsyncpa [#allocation9], 1
    %1027 = vsyncpa [#allocation4], 1

</llo_original>
